<compile_context>
chip_gen: v6e
topology: v6e:2x2x1
jax: 0.10.0
libtpu: 0.0.40
codegen_flags: <defaults>
</compile_context>

<pallas_src>
import functools

import jax
import jax.numpy as jnp
from jax.experimental import pallas as pl
from jax.experimental.pallas import tpu as pltpu

_VMEM_BUDGET_BYTES = 40 * 1024 * 1024   # tile-selection budget (v7x-safe)
_VMEM_LIMIT_BYTES = 48 * 1024 * 1024    # scoped VMEM limit (> v5e 16 MiB default)


def lstm_cell_kernel(x_ref, h_ref, c_ref, wx_ref, wh_ref, b_ref,
                     h_out_ref, c_out_ref):
    mxu_dtype = wx_ref.dtype

    # Fused gate pre-activation: x @ Wx + h @ Wh + b, f32 accumulation.
    z = (jnp.dot(x_ref[...].astype(mxu_dtype), wx_ref[...],
                 preferred_element_type=jnp.float32)
         + jnp.dot(h_ref[...].astype(mxu_dtype), wh_ref[...],
                   preferred_element_type=jnp.float32)
         + b_ref[...])

    s = jax.nn.sigmoid(z)        # f == i == o (shared Linear)
    g = jnp.tanh(z)

    c_new = (c_ref[...].astype(jnp.float32) + g) * s   # c*f + g*i with f==i==s
    h_new = jnp.tanh(c_new) * s                        # tanh(c_new) * o

    h_out_ref[...] = h_new.astype(h_out_ref.dtype)     # compute dtype (bf16 prod)
    c_out_ref[...] = c_new.astype(c_out_ref.dtype)     # f32 state


def prepack_lstm_params(weight, bias, input_size, compute_dtype=jnp.bfloat16):
    """One-time prepack: split + transpose the shared gate weight.

    weight: [H, I+H] (PyTorch nn.Linear; cat order is (input, h_t)).
    bias:   [H].
    Returns (w_x [I,H], w_h [H,H]) in compute_dtype and bias [1,H] f32.
    """
    w = jnp.asarray(weight)
    w_x = w[:, :input_size].T.astype(compute_dtype)
    w_h = w[:, input_size:].T.astype(compute_dtype)
    b2 = jnp.asarray(bias).reshape(1, -1).astype(jnp.float32)
    return w_x, w_h, b2


def _pick_block_b(B, I, H, x_isz, h_isz, c_isz, w_isz, hout_isz):
    """Largest batch tile that fits the VMEM budget; prefers >=2 grid steps."""
    # Resident params (counted double-buffered to be conservative) + headroom.
    fixed = 2 * (I * H + H * H) * w_isz + 2 * H * 4 + (2 << 20)
    # Per batch-row cost: double-buffered x/h/c inputs and h/c outputs, plus
    # ~4 f32 [block_b, H] intermediates (z, s, g, c_new) of working set.
    per_row = (2 * (I * x_isz + H * h_isz + H * c_isz + H * hout_isz + H * 4)
               + 4 * H * 4)
    row_budget = max(_VMEM_BUDGET_BYTES - fixed, 0)

    cands = [c for c in (2048, 1024, 512, 256, 128, 64, 32, 16, 8) if B % c == 0]
    if not cands:
        return B                      # tiny / odd batch: single full block
    fits = [c for c in cands if c * per_row <= row_budget]
    if not fits:
        return cands[-1]              # smallest divisor; compiler copes
    multi = [c for c in fits if B // c >= 2]   # keep both v7x TCs busy
    return max(multi) if multi else max(fits)


def _param_spec(shape, single_buffer):
    if single_buffer:
        # Constant block index -> fetched once; single-buffer to halve VMEM.
        return pl.BlockSpec(shape, lambda i: (0, 0), pipeline_mode=pl.Buffered(1))
    return pl.BlockSpec(shape, lambda i: (0, 0))


@functools.partial(jax.jit, static_argnames=("single_buffer_params",))
def _lstm_cell_impl(x, h_t, c_t, w_x, w_h, b2, *, single_buffer_params=True):
    B, I = x.shape
    H = h_t.shape[1]
    assert w_x.shape == (I, H) and w_h.shape == (H, H) and b2.shape == (1, H)
    assert c_t.shape == (B, H)

    h_out_dtype = w_x.dtype           # production: bf16; f32 path: f32
    block_b = _pick_block_b(B, I, H,
                            x.dtype.itemsize, h_t.dtype.itemsize,
                            c_t.dtype.itemsize, w_x.dtype.itemsize,
                            jnp.dtype(h_out_dtype).itemsize)
    grid = (B // block_b,)

    h_new, c_new = pl.pallas_call(
        lstm_cell_kernel,
        grid=grid,
        in_specs=[
            pl.BlockSpec((block_b, I), lambda i: (i, 0)),   # x batch tile
            pl.BlockSpec((block_b, H), lambda i: (i, 0)),   # h_t batch tile
            pl.BlockSpec((block_b, H), lambda i: (i, 0)),   # c_t batch tile
            _param_spec((I, H), single_buffer_params),      # resident W_x
            _param_spec((H, H), single_buffer_params),      # resident W_h
            _param_spec((1, H), single_buffer_params),      # resident bias
        ],
        out_specs=[
            pl.BlockSpec((block_b, H), lambda i: (i, 0)),   # h_new
            pl.BlockSpec((block_b, H), lambda i: (i, 0)),   # c_new
        ],
        out_shape=[
            jax.ShapeDtypeStruct((B, H), h_out_dtype),
            jax.ShapeDtypeStruct((B, H), jnp.float32),
        ],
        compiler_params=pltpu.CompilerParams(
            dimension_semantics=("parallel",),
            vmem_limit_bytes=_VMEM_LIMIT_BYTES,
        ),
    )(x, h_t, c_t, w_x, w_h, b2)
    return h_new, c_new


def lstm_cell(x, h_t, c_t, params):
    """One LSTMcell step. `params` comes from prepack_lstm_params."""
    w_x, w_h, b2 = params
    try:
        # Preferred path: single-buffered resident params (saves VMEM).
        return _lstm_cell_impl(x, h_t, c_t, w_x, w_h, b2,
                               single_buffer_params=True)
    except Exception:
        # Fallback if this Pallas build rejects pipeline_mode=Buffered(1).
        return _lstm_cell_impl(x, h_t, c_t, w_x, w_h, b2,
                               single_buffer_params=False)


def lstm_cell_ref(x, h_t, c_t, weight, bias):
    """Pure-JAX f32 reference mirroring the PyTorch forward."""
    combined = jnp.concatenate([x, h_t], axis=1)
    z = combined @ weight.T + bias
    s = jax.nn.sigmoid(z)
    g = jnp.tanh(z)
    c_new = c_t * s + g * s
    h_new = jnp.tanh(c_new) * s
    return h_new, c_new


if __name__ == "__main__":
    B, I, H = 8, 16, 32
    key = jax.random.PRNGKey(0)
    k_x, k_h, k_c, k_w, k_b = jax.random.split(key, 5)

    x = jax.random.normal(k_x, (B, I), dtype=jnp.float32)
    h0 = jax.random.normal(k_h, (B, H), dtype=jnp.float32)
    c0 = jax.random.normal(k_c, (B, H), dtype=jnp.float32)

    # Deterministic parameter init (PyTorch nn.Linear-style uniform bound).
    bound = 1.0 / jnp.sqrt(jnp.float32(H + I))
    weight = jax.random.uniform(k_w, (H, H + I), jnp.float32, -bound, bound)
    bias = jax.random.uniform(k_b, (H,), jnp.float32, -bound, bound)

    h_ref, c_ref = lstm_cell_ref(x, h0, c0, weight, bias)

    # f32 MXU path: must match the reference tightly.
    params32 = prepack_lstm_params(weight, bias, I, compute_dtype=jnp.float32)
    h32, c32 = lstm_cell(x, h0, c0, params32)
    jax.block_until_ready((h32, c32))
    assert jnp.allclose(h32, h_ref, atol=1e-5, rtol=1e-5)
    assert jnp.allclose(c32, c_ref, atol=1e-5, rtol=1e-5)

    # bf16 MXU path (production configuration): h emitted in bf16, c in f32.
    params16 = prepack_lstm_params(weight, bias, I, compute_dtype=jnp.bfloat16)
    h16, c16 = lstm_cell(x, h0, c0, params16)
    jax.block_until_ready((h16, c16))
    assert jnp.allclose(h16.astype(jnp.float32), h_ref, atol=3e-2, rtol=3e-2)
    assert jnp.allclose(c16, c_ref, atol=3e-2, rtol=3e-2)

    print("KERNEL_OK")
</pallas_src>

<mosaic_0001>
module attributes {stable_mosaic.version = 11 : i64} {
  func.func @lstm_cell_kernel(%arg0: i32, %arg1: memref<8x16xf32, #tpu.memory_space<vmem>>, %arg2: memref<8x32xf32, #tpu.memory_space<vmem>>, %arg3: memref<8x32xf32, #tpu.memory_space<vmem>>, %arg4: memref<16x32xf32, #tpu.memory_space<vmem>>, %arg5: memref<32x32xf32, #tpu.memory_space<vmem>>, %arg6: memref<1x32xf32, #tpu.memory_space<vmem>>, %arg7: memref<8x32xf32, #tpu.memory_space<vmem>>, %arg8: memref<8x32xf32, #tpu.memory_space<vmem>>) attributes {dimension_semantics = [#tpu.dimension_semantics<parallel>], iteration_bounds = array<i64: 1>, scalar_prefetch = 0 : i64, scratch_operands = 0 : i64, tpu.core_type = #tpu.core_type<tc>, window_params = [{transform_indices = @transform_0, window_bounds = array<i64: 8, 16>}, {transform_indices = @transform_1, window_bounds = array<i64: 8, 32>}, {transform_indices = @transform_2, window_bounds = array<i64: 8, 32>}, {pipeline_mode = #tpu.pipeline_mode<synchronous>, transform_indices = @transform_3, window_bounds = array<i64: 16, 32>}, {pipeline_mode = #tpu.pipeline_mode<synchronous>, transform_indices = @transform_4, window_bounds = array<i64: 32, 32>}, {pipeline_mode = #tpu.pipeline_mode<synchronous>, transform_indices = @transform_5, window_bounds = array<i64: 1, 32>}, {transform_indices = @transform_6, window_bounds = array<i64: 8, 32>}, {transform_indices = @transform_7, window_bounds = array<i64: 8, 32>}]} {
    %c0 = arith.constant 0 : index
    %c0_0 = arith.constant 0 : index
    %0 = vector.load %arg1[%c0, %c0_0] : memref<8x16xf32, #tpu.memory_space<vmem>>, vector<8x16xf32>
    %c0_1 = arith.constant 0 : index
    %c0_2 = arith.constant 0 : index
    %1 = vector.load %arg4[%c0_1, %c0_2] : memref<16x32xf32, #tpu.memory_space<vmem>>, vector<16x32xf32>
    %cst = arith.constant dense<0.000000e+00> : vector<8x32xf32>
    %2 = tpu.matmul %0, %1, %cst {dimension_numbers = #tpu.dot_dimension_numbers<[1], [0], [0], [1], [0, 0, 1, 1], [], []>} : vector<8x16xf32>, vector<16x32xf32>, vector<8x32xf32> -> vector<8x32xf32>
    %c0_3 = arith.constant 0 : index
    %c0_4 = arith.constant 0 : index
    %3 = vector.load %arg2[%c0_3, %c0_4] : memref<8x32xf32, #tpu.memory_space<vmem>>, vector<8x32xf32>
    %c0_5 = arith.constant 0 : index
    %c0_6 = arith.constant 0 : index
    %4 = vector.load %arg5[%c0_5, %c0_6] : memref<32x32xf32, #tpu.memory_space<vmem>>, vector<32x32xf32>
    %cst_7 = arith.constant dense<0.000000e+00> : vector<8x32xf32>
    %5 = tpu.matmul %3, %4, %cst_7 {dimension_numbers = #tpu.dot_dimension_numbers<[1], [0], [0], [1], [0, 0, 1, 1], [], []>} : vector<8x32xf32>, vector<32x32xf32>, vector<8x32xf32> -> vector<8x32xf32>
    %6 = arith.addf %2, %5 : vector<8x32xf32>
    %c0_8 = arith.constant 0 : index
    %c0_9 = arith.constant 0 : index
    %7 = vector.load %arg6[%c0_8, %c0_9] : memref<1x32xf32, #tpu.memory_space<vmem>>, vector<1x32xf32>
    %8 = vector.broadcast %7 : vector<1x32xf32> to vector<8x32xf32>
    %9 = arith.addf %6, %8 : vector<8x32xf32>
    %10 = arith.negf %9 : vector<8x32xf32>
    %11 = math.exp %10 : vector<8x32xf32>
    %cst_10 = arith.constant 1.000000e+00 : f32
    %12 = vector.broadcast %cst_10 : f32 to vector<8x32xf32>
    %13 = arith.addf %12, %11 : vector<8x32xf32>
    %14 = arith.divf %12, %13 : vector<8x32xf32>
    %15 = math.tanh %9 : vector<8x32xf32>
    %c0_11 = arith.constant 0 : index
    %c0_12 = arith.constant 0 : index
    %16 = vector.load %arg3[%c0_11, %c0_12] : memref<8x32xf32, #tpu.memory_space<vmem>>, vector<8x32xf32>
    %17 = arith.addf %16, %15 : vector<8x32xf32>
    %18 = arith.mulf %17, %14 : vector<8x32xf32>
    %19 = math.tanh %18 : vector<8x32xf32>
    %20 = arith.mulf %19, %14 : vector<8x32xf32>
    %c0_13 = arith.constant 0 : index
    %c0_14 = arith.constant 0 : index
    %21 = vector.load %arg7[%c0_13, %c0_14] : memref<8x32xf32, #tpu.memory_space<vmem>>, vector<8x32xf32>
    tpu.vector_store %arg7[%c0_13, %c0_14], %20 {strides = array<i32>} : memref<8x32xf32, #tpu.memory_space<vmem>>, vector<8x32xf32>,
    %c0_15 = arith.constant 0 : index
    %c0_16 = arith.constant 0 : index
    %22 = vector.load %arg8[%c0_15, %c0_16] : memref<8x32xf32, #tpu.memory_space<vmem>>, vector<8x32xf32>
    tpu.vector_store %arg8[%c0_15, %c0_16], %18 {strides = array<i32>} : memref<8x32xf32, #tpu.memory_space<vmem>>, vector<8x32xf32>,
    return
  }
  func.func @transform_0(%arg0: i32) -> (i32, i32) {
    %c0_i32 = arith.constant 0 : i32
    %c0_i32_0 = arith.constant 0 : i32
    return %arg0, %c0_i32 : i32, i32
  }
  func.func @transform_1(%arg0: i32) -> (i32, i32) {
    %c0_i32 = arith.constant 0 : i32
    %c0_i32_0 = arith.constant 0 : i32
    return %arg0, %c0_i32 : i32, i32
  }
  func.func @transform_2(%arg0: i32) -> (i32, i32) {
    %c0_i32 = arith.constant 0 : i32
    %c0_i32_0 = arith.constant 0 : i32
    return %arg0, %c0_i32 : i32, i32
  }
  func.func @transform_3(%arg0: i32) -> (i32, i32) {
    %c0_i32 = arith.constant 0 : i32
    %c0_i32_0 = arith.constant 0 : i32
    %c0_i32_1 = arith.constant 0 : i32
    return %c0_i32, %c0_i32_0 : i32, i32
  }
  func.func @transform_4(%arg0: i32) -> (i32, i32) {
    %c0_i32 = arith.constant 0 : i32
    %c0_i32_0 = arith.constant 0 : i32
    %c0_i32_1 = arith.constant 0 : i32
    return %c0_i32, %c0_i32_0 : i32, i32
  }
  func.func @transform_5(%arg0: i32) -> (i32, i32) {
    %c0_i32 = arith.constant 0 : i32
    %c0_i32_0 = arith.constant 0 : i32
    %c0_i32_1 = arith.constant 0 : i32
    return %c0_i32, %c0_i32_0 : i32, i32
  }
  func.func @transform_6(%arg0: i32) -> (i32, i32) {
    %c0_i32 = arith.constant 0 : i32
    %c0_i32_0 = arith.constant 0 : i32
    return %arg0, %c0_i32 : i32, i32
  }
  func.func @transform_7(%arg0: i32) -> (i32, i32) {
    %c0_i32 = arith.constant 0 : i32
    %c0_i32_0 = arith.constant 0 : i32
    return %arg0, %c0_i32 : i32, i32
  }
}

module attributes {stable_mosaic.version = 11 : i64} {
  func.func @lstm_cell_kernel(%arg0: i32, %arg1: memref<8x16xf32, #tpu.memory_space<vmem>>, %arg2: memref<8x32xf32, #tpu.memory_space<vmem>>, %arg3: memref<8x32xf32, #tpu.memory_space<vmem>>, %arg4: memref<16x32xf32, #tpu.memory_space<vmem>>, %arg5: memref<32x32xf32, #tpu.memory_space<vmem>>, %arg6: memref<1x32xf32, #tpu.memory_space<vmem>>, %arg7: memref<8x32xf32, #tpu.memory_space<vmem>>, %arg8: memref<8x32xf32, #tpu.memory_space<vmem>>) attributes {dimension_semantics = [#tpu.dimension_semantics<parallel>], iteration_bounds = array<i64: 1>, scalar_prefetch = 0 : i64, scratch_operands = 0 : i64, tpu.core_type = #tpu.core_type<tc>, window_params = [{transform_indices = @transform_0, window_bounds = array<i64: 8, 16>}, {transform_indices = @transform_1, window_bounds = array<i64: 8, 32>}, {transform_indices = @transform_2, window_bounds = array<i64: 8, 32>}, {pipeline_mode = #tpu.pipeline_mode<synchronous>, transform_indices = @transform_3, window_bounds = array<i64: 16, 32>}, {pipeline_mode = #tpu.pipeline_mode<synchronous>, transform_indices = @transform_4, window_bounds = array<i64: 32, 32>}, {pipeline_mode = #tpu.pipeline_mode<synchronous>, transform_indices = @transform_5, window_bounds = array<i64: 1, 32>}, {transform_indices = @transform_6, window_bounds = array<i64: 8, 32>}, {transform_indices = @transform_7, window_bounds = array<i64: 8, 32>}]} {
    %c0 = arith.constant 0 : index
    %c0_0 = arith.constant 0 : index
    %0 = vector.load %arg1[%c0, %c0_0] : memref<8x16xf32, #tpu.memory_space<vmem>>, vector<8x16xf32>
    %c0_1 = arith.constant 0 : index
    %c0_2 = arith.constant 0 : index
    %1 = vector.load %arg4[%c0_1, %c0_2] : memref<16x32xf32, #tpu.memory_space<vmem>>, vector<16x32xf32>
    %cst = arith.constant dense<0.000000e+00> : vector<8x32xf32>
    %2 = tpu.matmul %0, %1, %cst {dimension_numbers = #tpu.dot_dimension_numbers<[1], [0], [0], [1], [0, 0, 1, 1], [], []>} : vector<8x16xf32>, vector<16x32xf32>, vector<8x32xf32> -> vector<8x32xf32>
    %c0_3 = arith.constant 0 : index
    %c0_4 = arith.constant 0 : index
    %3 = vector.load %arg2[%c0_3, %c0_4] : memref<8x32xf32, #tpu.memory_space<vmem>>, vector<8x32xf32>
    %c0_5 = arith.constant 0 : index
    %c0_6 = arith.constant 0 : index
    %4 = vector.load %arg5[%c0_5, %c0_6] : memref<32x32xf32, #tpu.memory_space<vmem>>, vector<32x32xf32>
    %cst_7 = arith.constant dense<0.000000e+00> : vector<8x32xf32>
    %5 = tpu.matmul %3, %4, %cst_7 {dimension_numbers = #tpu.dot_dimension_numbers<[1], [0], [0], [1], [0, 0, 1, 1], [], []>} : vector<8x32xf32>, vector<32x32xf32>, vector<8x32xf32> -> vector<8x32xf32>
    %6 = arith.addf %2, %5 : vector<8x32xf32>
    %c0_8 = arith.constant 0 : index
    %c0_9 = arith.constant 0 : index
    %7 = vector.load %arg6[%c0_8, %c0_9] : memref<1x32xf32, #tpu.memory_space<vmem>>, vector<1x32xf32>
    %8 = vector.broadcast %7 : vector<1x32xf32> to vector<8x32xf32>
    %9 = arith.addf %6, %8 : vector<8x32xf32>
    %10 = arith.negf %9 : vector<8x32xf32>
    %11 = math.exp %10 : vector<8x32xf32>
    %cst_10 = arith.constant 1.000000e+00 : f32
    %12 = vector.broadcast %cst_10 : f32 to vector<8x32xf32>
    %13 = arith.addf %12, %11 : vector<8x32xf32>
    %14 = arith.divf %12, %13 : vector<8x32xf32>
    %15 = math.tanh %9 : vector<8x32xf32>
    %c0_11 = arith.constant 0 : index
    %c0_12 = arith.constant 0 : index
    %16 = vector.load %arg3[%c0_11, %c0_12] : memref<8x32xf32, #tpu.memory_space<vmem>>, vector<8x32xf32>
    %17 = arith.addf %16, %15 : vector<8x32xf32>
    %18 = arith.mulf %17, %14 : vector<8x32xf32>
    %19 = math.tanh %18 : vector<8x32xf32>
    %20 = arith.mulf %19, %14 : vector<8x32xf32>
    %c0_13 = arith.constant 0 : index
    %c0_14 = arith.constant 0 : index
    %21 = vector.load %arg7[%c0_13, %c0_14] : memref<8x32xf32, #tpu.memory_space<vmem>>, vector<8x32xf32>
    tpu.vector_store %arg7[%c0_13, %c0_14], %20 {strides = array<i32>} : memref<8x32xf32, #tpu.memory_space<vmem>>, vector<8x32xf32>,
    %c0_15 = arith.constant 0 : index
    %c0_16 = arith.constant 0 : index
    %22 = vector.load %arg8[%c0_15, %c0_16] : memref<8x32xf32, #tpu.memory_space<vmem>>, vector<8x32xf32>
    tpu.vector_store %arg8[%c0_15, %c0_16], %18 {strides = array<i32>} : memref<8x32xf32, #tpu.memory_space<vmem>>, vector<8x32xf32>,
    return
  }
  func.func @transform_0(%arg0: i32) -> (i32, i32) {
    %c0_i32 = arith.constant 0 : i32
    %c0_i32_0 = arith.constant 0 : i32
    return %arg0, %c0_i32 : i32, i32
  }
  func.func @transform_1(%arg0: i32) -> (i32, i32) {
    %c0_i32 = arith.constant 0 : i32
    %c0_i32_0 = arith.constant 0 : i32
    return %arg0, %c0_i32 : i32, i32
  }
  func.func @transform_2(%arg0: i32) -> (i32, i32) {
    %c0_i32 = arith.constant 0 : i32
    %c0_i32_0 = arith.constant 0 : i32
    return %arg0, %c0_i32 : i32, i32
  }
  func.func @transform_3(%arg0: i32) -> (i32, i32) {
    %c0_i32 = arith.constant 0 : i32
    %c0_i32_0 = arith.constant 0 : i32
    %c0_i32_1 = arith.constant 0 : i32
    return %c0_i32, %c0_i32_0 : i32, i32
  }
  func.func @transform_4(%arg0: i32) -> (i32, i32) {
    %c0_i32 = arith.constant 0 : i32
    %c0_i32_0 = arith.constant 0 : i32
    %c0_i32_1 = arith.constant 0 : i32
    return %c0_i32, %c0_i32_0 : i32, i32
  }
  func.func @transform_5(%arg0: i32) -> (i32, i32) {
    %c0_i32 = arith.constant 0 : i32
    %c0_i32_0 = arith.constant 0 : i32
    %c0_i32_1 = arith.constant 0 : i32
    return %c0_i32, %c0_i32_0 : i32, i32
  }
  func.func @transform_6(%arg0: i32) -> (i32, i32) {
    %c0_i32 = arith.constant 0 : i32
    %c0_i32_0 = arith.constant 0 : i32
    return %arg0, %c0_i32 : i32, i32
  }
  func.func @transform_7(%arg0: i32) -> (i32, i32) {
    %c0_i32 = arith.constant 0 : i32
    %c0_i32_0 = arith.constant 0 : i32
    return %arg0, %c0_i32 : i32, i32
  }
}

</mosaic_0001>

<llo_original>
// kernel: _lstm_cell_impl.1
$region0: #{_lstm_cell_impl.1}
  #allocation0 [shape = 'u32[]', space=smem, size = 0x4, offset = 0x4, fixed_abs, tag = 'smem constant byte address 0x4 - core index']
  #allocation1 [shape = 'u32[144,128]{1,0:T(1,128)}', space=vmem, size = 0x12000, scoped, tag = 'internal scratch']
  %s0 = inlined_call_operand.hbm [shape: f32[8,16], index: 0, kind: input, shape index: {}]
  %s1 = inlined_call_operand.hbm [shape: f32[8,32], index: 1, kind: input, shape index: {}]
  %s2 = inlined_call_operand.hbm [shape: f32[8,32], index: 2, kind: input, shape index: {}]
  %s3 = inlined_call_operand.hbm [shape: f32[16,32], index: 3, kind: input, shape index: {}]
  %s4 = inlined_call_operand.hbm [shape: f32[32,32], index: 4, kind: input, shape index: {}]
  %s5 = inlined_call_operand.vmem [shape: f32[1,32], index: 5, kind: input, shape index: {}]
  %s6 = inlined_call_operand.hbm [shape: f32[8,32], index: 6, kind: output, shape index: {0}]
  %s7 = inlined_call_operand.hbm [shape: f32[8,32], index: 7, kind: output, shape index: {1}]
  %8 = xla_tuple %s6, %s7
  %s9 = sld [smem:[#allocation0]]
  $region62: #{_lstm_cell_impl.1} parent=0
    _
  %s11 = ssub.s32 1, %s9
  %s12 = scalar_select 0, %s11, %s9
  $region1: #{_lstm_cell_impl.1} parent=0
    #allocation2 [shape = 'u8[4096]{0}', space=vmem, size = 0x1000, scoped, tag = 'input window, operand 0, single buffered']
    #allocation3 [shape = 's32[1]{0}', space=sflag, size = 0x4, scoped, tag = 'scoped memory for _lstm_cell_impl.1']
    #allocation4 [shape = 's32[1]{0}', space=sflag, size = 0x4, scoped, tag = 'scoped memory for _lstm_cell_impl.1']
    #allocation5 [shape = 'u8[4096]{0}', space=vmem, size = 0x1000, scoped, tag = 'input window, operand 1, single buffered']
    #allocation6 [shape = 's32[1]{0}', space=sflag, size = 0x4, scoped, tag = 'scoped memory for _lstm_cell_impl.1']
    #allocation7 [shape = 'u8[4096]{0}', space=vmem, size = 0x1000, scoped, tag = 'input window, operand 2, single buffered']
    #allocation8 [shape = 'u8[8192]{0}', space=vmem, size = 0x2000, scoped, tag = 'input window, operand 3, single buffered']
    #allocation9 [shape = 's32[1]{0}', space=sflag, size = 0x4, scoped, tag = 'scoped memory for _lstm_cell_impl.1']
    #allocation10 [shape = 'u8[16384]{0}', space=vmem, size = 0x4000, scoped, tag = 'input window, operand 4, single buffered']
    #allocation11 [shape = 'u8[4096]{0}', space=vmem, size = 0x1000, scoped, tag = 'output window, operand 0, single buffered']
    #allocation12 [shape = 'u8[4096]{0}', space=vmem, size = 0x1000, scoped, tag = 'output window, operand 1, single buffered']
    #allocation13 [shape = 's32[1]{0}', space=sflag, size = 0x4, scoped, tag = 'scoped memory for _lstm_cell_impl.1']
    %13 = vsyncpa [#allocation3], 0
    %14 = vsyncpa [#allocation6], 0
    %15 = vsyncpa [#allocation9], 0
    %16 = vsyncpa [#allocation4], 0
    %17 = vsyncpa [#allocation13], 0
    // Predicated region
    $region2: #{_lstm_cell_impl.1} parent=1 // pred_check
      _
    $region3: #{_lstm_cell_impl.1} parent=1 // pred_check_branch
      %19 = sbr.rel (0) target = $region5
    $region4: #{_lstm_cell_impl.1} parent=1 // pred_region
      %s21 = ssub.s32 128, 128
      %22 = vsyncadd [#allocation3], %s21
      %s24 = sshll.u32 [#allocation2], 4
      %s25 = int_to_ptr.vmem [resolvable:$true] %s24
      %27 = dma.hbm_to_vmem [thread:$0]  %s0, 128, %s25, [#allocation3]
    $region5: #{_lstm_cell_impl.1} parent=1 // pred_fallthru
      _
    // Predicated region
    $region6: #{_lstm_cell_impl.1} parent=1 // pred_check
      _
    $region7: #{_lstm_cell_impl.1} parent=1 // pred_check_branch
      %29 = sbr.rel (0) target = $region9
    $region8: #{_lstm_cell_impl.1} parent=1 // pred_region
      %s31 = ssub.s32 128, 128
      %32 = vsyncadd [#allocation6], %s31
      %s34 = sshll.u32 [#allocation5], 4
      %s35 = int_to_ptr.vmem [resolvable:$true] %s34
      %37 = dma.hbm_to_vmem [thread:$0]  %s1, 128, %s35, [#allocation6]
    $region9: #{_lstm_cell_impl.1} parent=1 // pred_fallthru
      _
    // Predicated region
    $region10: #{_lstm_cell_impl.1} parent=1 // pred_check
      _
    $region11: #{_lstm_cell_impl.1} parent=1 // pred_check_branch
      %39 = sbr.rel (0) target = $region13
    $region12: #{_lstm_cell_impl.1} parent=1 // pred_region
      %s41 = ssub.s32 128, 128
      %42 = vsyncadd [#allocation6], %s41
      %s44 = sshll.u32 [#allocation7], 4
      %s45 = int_to_ptr.vmem [resolvable:$true] %s44
      %47 = dma.hbm_to_vmem [thread:$0]  %s2, 128, %s45, [#allocation6]
    $region13: #{_lstm_cell_impl.1} parent=1 // pred_fallthru
      _
    // Predicated region
    $region14: #{_lstm_cell_impl.1} parent=1 // pred_check
      _
    $region15: #{_lstm_cell_impl.1} parent=1 // pred_check_branch
      %49 = sbr.rel (0) target = $region17
    $region16: #{_lstm_cell_impl.1} parent=1 // pred_region
      %s51 = ssub.s32 256, 256
      %52 = vsyncadd [#allocation9], %s51
      %s53 = sshll.u32 [#allocation8], 4
      %s54 = int_to_ptr.vmem [resolvable:$true] %s53
      %59 = dma.hbm_to_vmem [thread:$0]  %s3, 256, %s54, [#allocation9], 128, 128, 8
    $region17: #{_lstm_cell_impl.1} parent=1 // pred_fallthru
      _
    // Predicated region
    $region18: #{_lstm_cell_impl.1} parent=1 // pred_check
      _
    $region19: #{_lstm_cell_impl.1} parent=1 // pred_check_branch
      %61 = sbr.rel (0) target = $region21
    $region20: #{_lstm_cell_impl.1} parent=1 // pred_region
      %s63 = ssub.s32 512, 512
      %64 = vsyncadd [#allocation9], %s63
      %s65 = sshll.u32 [#allocation10], 4
      %s66 = int_to_ptr.vmem [resolvable:$true] %s65
      %71 = dma.hbm_to_vmem [thread:$0]  %s4, 512, %s66, [#allocation9], 128, 128, 8
    $region21: #{_lstm_cell_impl.1} parent=1 // pred_fallthru
      _
    // Predicated region
    $region22: #{_lstm_cell_impl.1} parent=1 // pred_check
      _
    $region23: #{_lstm_cell_impl.1} parent=1 // pred_check_branch
      %73 = sbr.rel (0) target = $region25
    $region24: #{_lstm_cell_impl.1} parent=1 // pred_region
      _
    $region25: #{_lstm_cell_impl.1} parent=1 // pred_fallthru
      _
    // Predicated region
    $region26: #{_lstm_cell_impl.1} parent=1 // pred_check
      _
    $region27: #{_lstm_cell_impl.1} parent=1 // pred_check_branch
      %75 = sbr.rel (0) target = $region29
    $region28: #{_lstm_cell_impl.1} parent=1 // pred_region
      %76 = dma.done [#allocation3], 128
    $region29: #{_lstm_cell_impl.1} parent=1 // pred_fallthru
      _
    // Predicated region
    $region30: #{_lstm_cell_impl.1} parent=1 // pred_check
      _
    $region31: #{_lstm_cell_impl.1} parent=1 // pred_check_branch
      %78 = sbr.rel (0) target = $region33
    $region32: #{_lstm_cell_impl.1} parent=1 // pred_region
      %79 = dma.done [#allocation6], 128
    $region33: #{_lstm_cell_impl.1} parent=1 // pred_fallthru
      _
    // Predicated region
    $region34: #{_lstm_cell_impl.1} parent=1 // pred_check
      _
    $region35: #{_lstm_cell_impl.1} parent=1 // pred_check_branch
      %81 = sbr.rel (0) target = $region37
    $region36: #{_lstm_cell_impl.1} parent=1 // pred_region
      %82 = dma.done [#allocation6], 128
    $region37: #{_lstm_cell_impl.1} parent=1 // pred_fallthru
      _
    // Predicated region
    $region38: #{_lstm_cell_impl.1} parent=1 // pred_check
      _
    $region39: #{_lstm_cell_impl.1} parent=1 // pred_check_branch
      %84 = sbr.rel (0) target = $region41
    $region40: #{_lstm_cell_impl.1} parent=1 // pred_region
      %85 = dma.done [#allocation9], 256
    $region41: #{_lstm_cell_impl.1} parent=1 // pred_fallthru
      _
    // Predicated region
    $region42: #{_lstm_cell_impl.1} parent=1 // pred_check
      _
    $region43: #{_lstm_cell_impl.1} parent=1 // pred_check_branch
      %87 = sbr.rel (0) target = $region45
    $region44: #{_lstm_cell_impl.1} parent=1 // pred_region
      %88 = dma.done [#allocation9], 512
    $region45: #{_lstm_cell_impl.1} parent=1 // pred_fallthru
      _
    %v89 = vld [vmem:[#allocation2] sm:$0xff]
    %v90 = vld [vmem:[#allocation8] sm:$0xff]
    %v91 = vld [vmem:[#allocation8 + $0x8] sm:$0xff]
    %v92 = vld [vmem:[#allocation5] sm:$0xff]
    %v93 = vld [vmem:[#allocation10] sm:$0xff]
    %v94 = vld [vmem:[#allocation10 + $0x8] sm:$0xff]
    %v95 = vld [vmem:[#allocation10 + $0x10] sm:$0xff]
    %v96 = vld [vmem:[#allocation10 + $0x18] sm:$0xff]
    %vm97 = vcmask 261120
    %v99 = vsel %vm97, %v92, 0
    %101 = vmatprep.subr.mxu0 0.0
    %102 = vmatpush1.msra.mxu0 0.0
    %103 = vmatprep.subr.mxu0 0.0
    %104 = vmatpush1.msra.mxu0 0.0
    %105 = vmatprep.subr.mxu0 0.0
    %106 = vmatpush1.msra.mxu0 0.0
    %107 = vmatprep.subr.mxu0 0.0
    %108 = vmatpush1.msra.mxu0 0.0
    %109 = vmatprep.subr.mxu0 0.0
    %110 = vmatpush1.msra.mxu0 0.0
    %111 = vmatprep.subr.mxu0 0.0
    %112 = vmatpush1.msra.mxu0 0.0
    %113 = vmatprep.subr.mxu0 0.0
    %114 = vmatpush1.msra.mxu0 0.0
    %115 = vmatprep.subr.mxu0 0.0
    %116 = vmatpush1.msra.mxu0 0.0
    %117 = vmatprep.subr.mxu0 0.0
    %118 = vmatpush1.msra.mxu0 0.0
    %119 = vmatprep.subr.mxu0 0.0
    %120 = vmatpush1.msra.mxu0 0.0
    %121 = vmatprep.subr.mxu0 0.0
    %122 = vmatpush1.msra.mxu0 0.0
    %123 = vmatprep.subr.mxu0 0.0
    %124 = vmatpush1.msra.mxu0 0.0
    %125 = vmatprep.subr.mxu0 0.0
    %126 = vmatpush1.msra.mxu0 %v96
    %127 = vmatprep.subr.mxu0 0.0
    %128 = vmatpush1.msra.mxu0 %v95
    %129 = vmatprep.subr.mxu0 0.0
    %130 = vmatpush1.msra.mxu0 %v94
    %131 = vmatprep.subr.mxu0 0.0
    %132 = vmatpush1.msra.mxu0 %v93
    %133 = vmatprep.subr.mxu0 0.0
    %134 = vmatpush2.msra.mxu0 0.0
    %135 = vmatprep.subr.mxu0 0.0
    %136 = vmatpush2.msra.mxu0 0.0
    %137 = vmatprep.subr.mxu0 0.0
    %138 = vmatpush2.msra.mxu0 0.0
    %139 = vmatprep.subr.mxu0 0.0
    %140 = vmatpush2.msra.mxu0 0.0
    %141 = vmatprep.subr.mxu0 0.0
    %142 = vmatpush2.msra.mxu0 0.0
    %143 = vmatprep.subr.mxu0 0.0
    %144 = vmatpush2.msra.mxu0 0.0
    %145 = vmatprep.subr.mxu0 0.0
    %146 = vmatpush2.msra.mxu0 0.0
    %147 = vmatprep.subr.mxu0 0.0
    %148 = vmatpush2.msra.mxu0 0.0
    %149 = vmatprep.subr.mxu0 0.0
    %150 = vmatpush2.msra.mxu0 0.0
    %151 = vmatprep.subr.mxu0 0.0
    %152 = vmatpush2.msra.mxu0 0.0
    %153 = vmatprep.subr.mxu0 0.0
    %154 = vmatpush2.msra.mxu0 0.0
    %155 = vmatprep.subr.mxu0 0.0
    %156 = vmatpush2.msra.mxu0 0.0
    %157 = vmatprep.subr.mxu0 0.0
    %158 = vmatpush2.msra.mxu0 0.0
    %159 = vmatprep.subr.mxu0 0.0
    %160 = vmatpush2.msra.mxu0 0.0
    %161 = vmatprep.subr.mxu0 0.0
    %162 = vmatpush2.msra.mxu0 0.0
    %163 = vmatprep.subr.mxu0 0.0
    %164 = vmatpush2.msra.mxu0 0.0
    %165 = vmatprep.mubr.f32.mxu0 0.0
    %166 = vmatmul.mubr.f32.gmra.mxu0 %v99
    %v167 = vpop.f32.mrf.mxu0
    %v168 = vadd.f32 0.0, %v167
    %v169 = vpop.f32.mrf.mxu0
    %170 = vdwg.mxu0
    %vm171 = vcmask 130048
    %v173 = vsel %vm171, %v89, 0
    %175 = vmatprep.subr.mxu0 0.0
    %176 = vmatpush1.msra.mxu0 0.0
    %177 = vmatprep.subr.mxu0 0.0
    %178 = vmatpush1.msra.mxu0 0.0
    %179 = vmatprep.subr.mxu0 0.0
    %180 = vmatpush1.msra.mxu0 0.0
    %181 = vmatprep.subr.mxu0 0.0
    %182 = vmatpush1.msra.mxu0 0.0
    %183 = vmatprep.subr.mxu0 0.0
    %184 = vmatpush1.msra.mxu0 0.0
    %185 = vmatprep.subr.mxu0 0.0
    %186 = vmatpush1.msra.mxu0 0.0
    %187 = vmatprep.subr.mxu0 0.0
    %188 = vmatpush1.msra.mxu0 0.0
    %189 = vmatprep.subr.mxu0 0.0
    %190 = vmatpush1.msra.mxu0 0.0
    %191 = vmatprep.subr.mxu0 0.0
    %192 = vmatpush1.msra.mxu0 0.0
    %193 = vmatprep.subr.mxu0 0.0
    %194 = vmatpush1.msra.mxu0 0.0
    %195 = vmatprep.subr.mxu0 0.0
    %196 = vmatpush1.msra.mxu0 0.0
    %197 = vmatprep.subr.mxu0 0.0
    %198 = vmatpush1.msra.mxu0 0.0
    %199 = vmatprep.subr.mxu0 0.0
    %200 = vmatpush1.msra.mxu0 0.0
    %201 = vmatprep.subr.mxu0 0.0
    %202 = vmatpush1.msra.mxu0 0.0
    %203 = vmatprep.subr.mxu0 0.0
    %204 = vmatpush1.msra.mxu0 %v91
    %205 = vmatprep.subr.mxu0 0.0
    %206 = vmatpush1.msra.mxu0 %v90
    %207 = vmatprep.subr.mxu0 0.0
    %208 = vmatpush2.msra.mxu0 0.0
    %209 = vmatprep.subr.mxu0 0.0
    %210 = vmatpush2.msra.mxu0 0.0
    %211 = vmatprep.subr.mxu0 0.0
    %212 = vmatpush2.msra.mxu0 0.0
    %213 = vmatprep.subr.mxu0 0.0
    %214 = vmatpush2.msra.mxu0 0.0
    %215 = vmatprep.subr.mxu0 0.0
    %216 = vmatpush2.msra.mxu0 0.0
    %217 = vmatprep.subr.mxu0 0.0
    %218 = vmatpush2.msra.mxu0 0.0
    %219 = vmatprep.subr.mxu0 0.0
    %220 = vmatpush2.msra.mxu0 0.0
    %221 = vmatprep.subr.mxu0 0.0
    %222 = vmatpush2.msra.mxu0 0.0
    %223 = vmatprep.subr.mxu0 0.0
    %224 = vmatpush2.msra.mxu0 0.0
    %225 = vmatprep.subr.mxu0 0.0
    %226 = vmatpush2.msra.mxu0 0.0
    %227 = vmatprep.subr.mxu0 0.0
    %228 = vmatpush2.msra.mxu0 0.0
    %229 = vmatprep.subr.mxu0 0.0
    %230 = vmatpush2.msra.mxu0 0.0
    %231 = vmatprep.subr.mxu0 0.0
    %232 = vmatpush2.msra.mxu0 0.0
    %233 = vmatprep.subr.mxu0 0.0
    %234 = vmatpush2.msra.mxu0 0.0
    %235 = vmatprep.subr.mxu0 0.0
    %236 = vmatpush2.msra.mxu0 0.0
    %237 = vmatprep.subr.mxu0 0.0
    %238 = vmatpush2.msra.mxu0 0.0
    %239 = vmatprep.mubr.f32.mxu0 0.0
    %240 = vmatmul.mubr.f32.gmra.mxu0 %v173
    %v241 = vpop.f32.mrf.mxu0
    %v242 = vadd.f32 %v168, %v241
    %v243 = vpop.f32.mrf.mxu0
    %244 = vdwg.mxu0
    %v245 = vld [vmem:[%s5] sm:$0x1]
    %v247 = vlaneseq
    %v248 = vshrl.u32 %v247, 7
    %v249 = vsub.s32 0, %v248
    %v250 = vrot.slane %v245, %v249
    %v252 = vadd.f32 %v242, %v250
    %v253 = vxor.u32 %v252, 2147483648
    %v254 = vmul.f32 %v253, 1.442695
    %v255 = vpow.pop %v254
    %v256 = vadd.f32 %v255, 1.0
    %v257 = vrcp.pop %v256
    %v258 = vmul.f32 1.0, %v257
    %v259 = vtanh.pop %v252
    %v260 = vld [vmem:[#allocation7] sm:$0xff]
    %v261 = vadd.f32 %v260, %v259
    %v262 = vmul.f32 %v261, %v258
    %v263 = vtanh.pop %v262
    %v264 = vmul.f32 %v263, %v258
    %265 = vst.msk [vmem:[#allocation11] sm:$0xff] %vm97, %v264
    %266 = vst.msk [vmem:[#allocation12] sm:$0xff] %vm97, %v262
    // Predicated region
    $region46: #{_lstm_cell_impl.1} parent=1 // pred_check
      _
    $region47: #{_lstm_cell_impl.1} parent=1 // pred_check_branch
      %268 = sbr.rel (0) target = $region49
    $region48: #{_lstm_cell_impl.1} parent=1 // pred_region
      %s270 = ssub.s32 128, 128
      %271 = vsyncadd [#allocation4], %s270
      %s273 = sshll.u32 [#allocation11], 4
      %s274 = int_to_ptr.vmem [resolvable:$true] %s273
      %276 = dma.vmem_to_hbm [thread:$0]  %s274, 128, %s6, [#allocation4]
    $region49: #{_lstm_cell_impl.1} parent=1 // pred_fallthru
      _
    // Predicated region
    $region50: #{_lstm_cell_impl.1} parent=1 // pred_check
      _
    $region51: #{_lstm_cell_impl.1} parent=1 // pred_check_branch
      %278 = sbr.rel (0) target = $region53
    $region52: #{_lstm_cell_impl.1} parent=1 // pred_region
      %s280 = ssub.s32 128, 128
      %281 = vsyncadd [#allocation13], %s280
      %s283 = sshll.u32 [#allocation12], 4
      %s284 = int_to_ptr.vmem [resolvable:$true] %s283
      %286 = dma.vmem_to_hbm [thread:$0]  %s284, 128, %s7, [#allocation13]
    $region53: #{_lstm_cell_impl.1} parent=1 // pred_fallthru
      _
    // Predicated region
    $region54: #{_lstm_cell_impl.1} parent=1 // pred_check
      _
    $region55: #{_lstm_cell_impl.1} parent=1 // pred_check_branch
      %288 = sbr.rel (0) target = $region57
    $region56: #{_lstm_cell_impl.1} parent=1 // pred_region
      %289 = dma.done [#allocation4], 128
    $region57: #{_lstm_cell_impl.1} parent=1 // pred_fallthru
      _
    // Predicated region
    $region58: #{_lstm_cell_impl.1} parent=1 // pred_check
      _
    $region59: #{_lstm_cell_impl.1} parent=1 // pred_check_branch
      %291 = sbr.rel (0) target = $region61
    $region60: #{_lstm_cell_impl.1} parent=1 // pred_region
      %292 = dma.done [#allocation13], 128
    $region61: #{_lstm_cell_impl.1} parent=1 // pred_fallthru
      _
    %293 = vsyncpa [#allocation3], 1
    %294 = vsyncpa [#allocation6], 1
    %295 = vsyncpa [#allocation9], 1
    %296 = vsyncpa [#allocation4], 1
    %297 = vsyncpa [#allocation13], 1

// kernel: _lstm_cell_impl.1
$region0: #{_lstm_cell_impl.1}
  #allocation0 [shape = 'u32[]', space=smem, size = 0x4, offset = 0x4, fixed_abs, tag = 'smem constant byte address 0x4 - core index']
  #allocation1 [shape = 'u32[144,128]{1,0:T(1,128)}', space=vmem, size = 0x12000, scoped, tag = 'internal scratch']
  %s0 = inlined_call_operand.hbm [shape: f32[8,16], index: 0, kind: input, shape index: {}]
  %s1 = inlined_call_operand.hbm [shape: f32[8,32], index: 1, kind: input, shape index: {}]
  %s2 = inlined_call_operand.hbm [shape: f32[8,32], index: 2, kind: input, shape index: {}]
  %s3 = inlined_call_operand.hbm [shape: f32[16,32], index: 3, kind: input, shape index: {}]
  %s4 = inlined_call_operand.hbm [shape: f32[32,32], index: 4, kind: input, shape index: {}]
  %s5 = inlined_call_operand.vmem [shape: f32[1,32], index: 5, kind: input, shape index: {}]
  %s6 = inlined_call_operand.hbm [shape: f32[8,32], index: 6, kind: output, shape index: {0}]
  %s7 = inlined_call_operand.hbm [shape: f32[8,32], index: 7, kind: output, shape index: {1}]
  %8 = xla_tuple %s6, %s7
  %s9 = sld [smem:[#allocation0]]
  $region62: #{_lstm_cell_impl.1} parent=0
    _
  %s11 = ssub.s32 1, %s9
  %s12 = scalar_select 0, %s11, %s9
  $region1: #{_lstm_cell_impl.1} parent=0
    #allocation2 [shape = 'u8[4096]{0}', space=vmem, size = 0x1000, scoped, tag = 'input window, operand 0, single buffered']
    #allocation3 [shape = 's32[1]{0}', space=sflag, size = 0x4, scoped, tag = 'scoped memory for _lstm_cell_impl.1']
    #allocation4 [shape = 's32[1]{0}', space=sflag, size = 0x4, scoped, tag = 'scoped memory for _lstm_cell_impl.1']
    #allocation5 [shape = 'u8[4096]{0}', space=vmem, size = 0x1000, scoped, tag = 'input window, operand 1, single buffered']
    #allocation6 [shape = 's32[1]{0}', space=sflag, size = 0x4, scoped, tag = 'scoped memory for _lstm_cell_impl.1']
    #allocation7 [shape = 'u8[4096]{0}', space=vmem, size = 0x1000, scoped, tag = 'input window, operand 2, single buffered']
    #allocation8 [shape = 'u8[8192]{0}', space=vmem, size = 0x2000, scoped, tag = 'input window, operand 3, single buffered']
    #allocation9 [shape = 's32[1]{0}', space=sflag, size = 0x4, scoped, tag = 'scoped memory for _lstm_cell_impl.1']
    #allocation10 [shape = 'u8[16384]{0}', space=vmem, size = 0x4000, scoped, tag = 'input window, operand 4, single buffered']
    #allocation11 [shape = 'u8[4096]{0}', space=vmem, size = 0x1000, scoped, tag = 'output window, operand 0, single buffered']
    #allocation12 [shape = 'u8[4096]{0}', space=vmem, size = 0x1000, scoped, tag = 'output window, operand 1, single buffered']
    #allocation13 [shape = 's32[1]{0}', space=sflag, size = 0x4, scoped, tag = 'scoped memory for _lstm_cell_impl.1']
    %13 = vsyncpa [#allocation3], 0
    %14 = vsyncpa [#allocation6], 0
    %15 = vsyncpa [#allocation9], 0
    %16 = vsyncpa [#allocation4], 0
    %17 = vsyncpa [#allocation13], 0
    // Predicated region
    $region2: #{_lstm_cell_impl.1} parent=1 // pred_check
      _
    $region3: #{_lstm_cell_impl.1} parent=1 // pred_check_branch
      %19 = sbr.rel (0) target = $region5
    $region4: #{_lstm_cell_impl.1} parent=1 // pred_region
      %s21 = ssub.s32 128, 128
      %22 = vsyncadd [#allocation3], %s21
      %s24 = sshll.u32 [#allocation2], 4
      %s25 = int_to_ptr.vmem [resolvable:$true] %s24
      %27 = dma.hbm_to_vmem [thread:$0]  %s0, 128, %s25, [#allocation3]
    $region5: #{_lstm_cell_impl.1} parent=1 // pred_fallthru
      _
    // Predicated region
    $region6: #{_lstm_cell_impl.1} parent=1 // pred_check
      _
    $region7: #{_lstm_cell_impl.1} parent=1 // pred_check_branch
      %29 = sbr.rel (0) target = $region9
    $region8: #{_lstm_cell_impl.1} parent=1 // pred_region
      %s31 = ssub.s32 128, 128
      %32 = vsyncadd [#allocation6], %s31
      %s34 = sshll.u32 [#allocation5], 4
      %s35 = int_to_ptr.vmem [resolvable:$true] %s34
      %37 = dma.hbm_to_vmem [thread:$0]  %s1, 128, %s35, [#allocation6]
    $region9: #{_lstm_cell_impl.1} parent=1 // pred_fallthru
      _
    // Predicated region
    $region10: #{_lstm_cell_impl.1} parent=1 // pred_check
      _
    $region11: #{_lstm_cell_impl.1} parent=1 // pred_check_branch
      %39 = sbr.rel (0) target = $region13
    $region12: #{_lstm_cell_impl.1} parent=1 // pred_region
      %s41 = ssub.s32 128, 128
      %42 = vsyncadd [#allocation6], %s41
      %s44 = sshll.u32 [#allocation7], 4
      %s45 = int_to_ptr.vmem [resolvable:$true] %s44
      %47 = dma.hbm_to_vmem [thread:$0]  %s2, 128, %s45, [#allocation6]
    $region13: #{_lstm_cell_impl.1} parent=1 // pred_fallthru
      _
    // Predicated region
    $region14: #{_lstm_cell_impl.1} parent=1 // pred_check
      _
    $region15: #{_lstm_cell_impl.1} parent=1 // pred_check_branch
      %49 = sbr.rel (0) target = $region17
    $region16: #{_lstm_cell_impl.1} parent=1 // pred_region
      %s51 = ssub.s32 256, 256
      %52 = vsyncadd [#allocation9], %s51
      %s53 = sshll.u32 [#allocation8], 4
      %s54 = int_to_ptr.vmem [resolvable:$true] %s53
      %59 = dma.hbm_to_vmem [thread:$0]  %s3, 256, %s54, [#allocation9], 128, 128, 8
    $region17: #{_lstm_cell_impl.1} parent=1 // pred_fallthru
      _
    // Predicated region
    $region18: #{_lstm_cell_impl.1} parent=1 // pred_check
      _
    $region19: #{_lstm_cell_impl.1} parent=1 // pred_check_branch
      %61 = sbr.rel (0) target = $region21
    $region20: #{_lstm_cell_impl.1} parent=1 // pred_region
      %s63 = ssub.s32 512, 512
      %64 = vsyncadd [#allocation9], %s63
      %s65 = sshll.u32 [#allocation10], 4
      %s66 = int_to_ptr.vmem [resolvable:$true] %s65
      %71 = dma.hbm_to_vmem [thread:$0]  %s4, 512, %s66, [#allocation9], 128, 128, 8
    $region21: #{_lstm_cell_impl.1} parent=1 // pred_fallthru
      _
    // Predicated region
    $region22: #{_lstm_cell_impl.1} parent=1 // pred_check
      _
    $region23: #{_lstm_cell_impl.1} parent=1 // pred_check_branch
      %73 = sbr.rel (0) target = $region25
    $region24: #{_lstm_cell_impl.1} parent=1 // pred_region
      _
    $region25: #{_lstm_cell_impl.1} parent=1 // pred_fallthru
      _
    // Predicated region
    $region26: #{_lstm_cell_impl.1} parent=1 // pred_check
      _
    $region27: #{_lstm_cell_impl.1} parent=1 // pred_check_branch
      %75 = sbr.rel (0) target = $region29
    $region28: #{_lstm_cell_impl.1} parent=1 // pred_region
      %76 = dma.done [#allocation3], 128
    $region29: #{_lstm_cell_impl.1} parent=1 // pred_fallthru
      _
    // Predicated region
    $region30: #{_lstm_cell_impl.1} parent=1 // pred_check
      _
    $region31: #{_lstm_cell_impl.1} parent=1 // pred_check_branch
      %78 = sbr.rel (0) target = $region33
    $region32: #{_lstm_cell_impl.1} parent=1 // pred_region
      %79 = dma.done [#allocation6], 128
    $region33: #{_lstm_cell_impl.1} parent=1 // pred_fallthru
      _
    // Predicated region
    $region34: #{_lstm_cell_impl.1} parent=1 // pred_check
      _
    $region35: #{_lstm_cell_impl.1} parent=1 // pred_check_branch
      %81 = sbr.rel (0) target = $region37
    $region36: #{_lstm_cell_impl.1} parent=1 // pred_region
      %82 = dma.done [#allocation6], 128
    $region37: #{_lstm_cell_impl.1} parent=1 // pred_fallthru
      _
    // Predicated region
    $region38: #{_lstm_cell_impl.1} parent=1 // pred_check
      _
    $region39: #{_lstm_cell_impl.1} parent=1 // pred_check_branch
      %84 = sbr.rel (0) target = $region41
    $region40: #{_lstm_cell_impl.1} parent=1 // pred_region
      %85 = dma.done [#allocation9], 256
    $region41: #{_lstm_cell_impl.1} parent=1 // pred_fallthru
      _
    // Predicated region
    $region42: #{_lstm_cell_impl.1} parent=1 // pred_check
      _
    $region43: #{_lstm_cell_impl.1} parent=1 // pred_check_branch
      %87 = sbr.rel (0) target = $region45
    $region44: #{_lstm_cell_impl.1} parent=1 // pred_region
      %88 = dma.done [#allocation9], 512
    $region45: #{_lstm_cell_impl.1} parent=1 // pred_fallthru
      _
    %v89 = vld [vmem:[#allocation2] sm:$0xff]
    %v90 = vld [vmem:[#allocation8] sm:$0xff]
    %v91 = vld [vmem:[#allocation8 + $0x8] sm:$0xff]
    %v92 = vld [vmem:[#allocation5] sm:$0xff]
    %v93 = vld [vmem:[#allocation10] sm:$0xff]
    %v94 = vld [vmem:[#allocation10 + $0x8] sm:$0xff]
    %v95 = vld [vmem:[#allocation10 + $0x10] sm:$0xff]
    %v96 = vld [vmem:[#allocation10 + $0x18] sm:$0xff]
    %vm97 = vcmask 261120
    %v99 = vsel %vm97, %v92, 0
    %101 = vmatprep.subr.mxu0 0.0
    %102 = vmatpush1.msra.mxu0 0.0
    %103 = vmatprep.subr.mxu0 0.0
    %104 = vmatpush1.msra.mxu0 0.0
    %105 = vmatprep.subr.mxu0 0.0
    %106 = vmatpush1.msra.mxu0 0.0
    %107 = vmatprep.subr.mxu0 0.0
    %108 = vmatpush1.msra.mxu0 0.0
    %109 = vmatprep.subr.mxu0 0.0
    %110 = vmatpush1.msra.mxu0 0.0
    %111 = vmatprep.subr.mxu0 0.0
    %112 = vmatpush1.msra.mxu0 0.0
    %113 = vmatprep.subr.mxu0 0.0
    %114 = vmatpush1.msra.mxu0 0.0
    %115 = vmatprep.subr.mxu0 0.0
    %116 = vmatpush1.msra.mxu0 0.0
    %117 = vmatprep.subr.mxu0 0.0
    %118 = vmatpush1.msra.mxu0 0.0
    %119 = vmatprep.subr.mxu0 0.0
    %120 = vmatpush1.msra.mxu0 0.0
    %121 = vmatprep.subr.mxu0 0.0
    %122 = vmatpush1.msra.mxu0 0.0
    %123 = vmatprep.subr.mxu0 0.0
    %124 = vmatpush1.msra.mxu0 0.0
    %125 = vmatprep.subr.mxu0 0.0
    %126 = vmatpush1.msra.mxu0 %v96
    %127 = vmatprep.subr.mxu0 0.0
    %128 = vmatpush1.msra.mxu0 %v95
    %129 = vmatprep.subr.mxu0 0.0
    %130 = vmatpush1.msra.mxu0 %v94
    %131 = vmatprep.subr.mxu0 0.0
    %132 = vmatpush1.msra.mxu0 %v93
    %133 = vmatprep.subr.mxu0 0.0
    %134 = vmatpush2.msra.mxu0 0.0
    %135 = vmatprep.subr.mxu0 0.0
    %136 = vmatpush2.msra.mxu0 0.0
    %137 = vmatprep.subr.mxu0 0.0
    %138 = vmatpush2.msra.mxu0 0.0
    %139 = vmatprep.subr.mxu0 0.0
    %140 = vmatpush2.msra.mxu0 0.0
    %141 = vmatprep.subr.mxu0 0.0
    %142 = vmatpush2.msra.mxu0 0.0
    %143 = vmatprep.subr.mxu0 0.0
    %144 = vmatpush2.msra.mxu0 0.0
    %145 = vmatprep.subr.mxu0 0.0
    %146 = vmatpush2.msra.mxu0 0.0
    %147 = vmatprep.subr.mxu0 0.0
    %148 = vmatpush2.msra.mxu0 0.0
    %149 = vmatprep.subr.mxu0 0.0
    %150 = vmatpush2.msra.mxu0 0.0
    %151 = vmatprep.subr.mxu0 0.0
    %152 = vmatpush2.msra.mxu0 0.0
    %153 = vmatprep.subr.mxu0 0.0
    %154 = vmatpush2.msra.mxu0 0.0
    %155 = vmatprep.subr.mxu0 0.0
    %156 = vmatpush2.msra.mxu0 0.0
    %157 = vmatprep.subr.mxu0 0.0
    %158 = vmatpush2.msra.mxu0 0.0
    %159 = vmatprep.subr.mxu0 0.0
    %160 = vmatpush2.msra.mxu0 0.0
    %161 = vmatprep.subr.mxu0 0.0
    %162 = vmatpush2.msra.mxu0 0.0
    %163 = vmatprep.subr.mxu0 0.0
    %164 = vmatpush2.msra.mxu0 0.0
    %165 = vmatprep.mubr.f32.mxu0 0.0
    %166 = vmatmul.mubr.f32.gmra.mxu0 %v99
    %v167 = vpop.f32.mrf.mxu0
    %v168 = vadd.f32 0.0, %v167
    %v169 = vpop.f32.mrf.mxu0
    %170 = vdwg.mxu0
    %vm171 = vcmask 130048
    %v173 = vsel %vm171, %v89, 0
    %175 = vmatprep.subr.mxu0 0.0
    %176 = vmatpush1.msra.mxu0 0.0
    %177 = vmatprep.subr.mxu0 0.0
    %178 = vmatpush1.msra.mxu0 0.0
    %179 = vmatprep.subr.mxu0 0.0
    %180 = vmatpush1.msra.mxu0 0.0
    %181 = vmatprep.subr.mxu0 0.0
    %182 = vmatpush1.msra.mxu0 0.0
    %183 = vmatprep.subr.mxu0 0.0
    %184 = vmatpush1.msra.mxu0 0.0
    %185 = vmatprep.subr.mxu0 0.0
    %186 = vmatpush1.msra.mxu0 0.0
    %187 = vmatprep.subr.mxu0 0.0
    %188 = vmatpush1.msra.mxu0 0.0
    %189 = vmatprep.subr.mxu0 0.0
    %190 = vmatpush1.msra.mxu0 0.0
    %191 = vmatprep.subr.mxu0 0.0
    %192 = vmatpush1.msra.mxu0 0.0
    %193 = vmatprep.subr.mxu0 0.0
    %194 = vmatpush1.msra.mxu0 0.0
    %195 = vmatprep.subr.mxu0 0.0
    %196 = vmatpush1.msra.mxu0 0.0
    %197 = vmatprep.subr.mxu0 0.0
    %198 = vmatpush1.msra.mxu0 0.0
    %199 = vmatprep.subr.mxu0 0.0
    %200 = vmatpush1.msra.mxu0 0.0
    %201 = vmatprep.subr.mxu0 0.0
    %202 = vmatpush1.msra.mxu0 0.0
    %203 = vmatprep.subr.mxu0 0.0
    %204 = vmatpush1.msra.mxu0 %v91
    %205 = vmatprep.subr.mxu0 0.0
    %206 = vmatpush1.msra.mxu0 %v90
    %207 = vmatprep.subr.mxu0 0.0
    %208 = vmatpush2.msra.mxu0 0.0
    %209 = vmatprep.subr.mxu0 0.0
    %210 = vmatpush2.msra.mxu0 0.0
    %211 = vmatprep.subr.mxu0 0.0
    %212 = vmatpush2.msra.mxu0 0.0
    %213 = vmatprep.subr.mxu0 0.0
    %214 = vmatpush2.msra.mxu0 0.0
    %215 = vmatprep.subr.mxu0 0.0
    %216 = vmatpush2.msra.mxu0 0.0
    %217 = vmatprep.subr.mxu0 0.0
    %218 = vmatpush2.msra.mxu0 0.0
    %219 = vmatprep.subr.mxu0 0.0
    %220 = vmatpush2.msra.mxu0 0.0
    %221 = vmatprep.subr.mxu0 0.0
    %222 = vmatpush2.msra.mxu0 0.0
    %223 = vmatprep.subr.mxu0 0.0
    %224 = vmatpush2.msra.mxu0 0.0
    %225 = vmatprep.subr.mxu0 0.0
    %226 = vmatpush2.msra.mxu0 0.0
    %227 = vmatprep.subr.mxu0 0.0
    %228 = vmatpush2.msra.mxu0 0.0
    %229 = vmatprep.subr.mxu0 0.0
    %230 = vmatpush2.msra.mxu0 0.0
    %231 = vmatprep.subr.mxu0 0.0
    %232 = vmatpush2.msra.mxu0 0.0
    %233 = vmatprep.subr.mxu0 0.0
    %234 = vmatpush2.msra.mxu0 0.0
    %235 = vmatprep.subr.mxu0 0.0
    %236 = vmatpush2.msra.mxu0 0.0
    %237 = vmatprep.subr.mxu0 0.0
    %238 = vmatpush2.msra.mxu0 0.0
    %239 = vmatprep.mubr.f32.mxu0 0.0
    %240 = vmatmul.mubr.f32.gmra.mxu0 %v173
    %v241 = vpop.f32.mrf.mxu0
    %v242 = vadd.f32 %v168, %v241
    %v243 = vpop.f32.mrf.mxu0
    %244 = vdwg.mxu0
    %v245 = vld [vmem:[%s5] sm:$0x1]
    %v247 = vlaneseq
    %v248 = vshrl.u32 %v247, 7
    %v249 = vsub.s32 0, %v248
    %v250 = vrot.slane %v245, %v249
    %v252 = vadd.f32 %v242, %v250
    %v253 = vxor.u32 %v252, 2147483648
    %v254 = vmul.f32 %v253, 1.442695
    %v255 = vpow.pop %v254
    %v256 = vadd.f32 %v255, 1.0
    %v257 = vrcp.pop %v256
    %v258 = vmul.f32 1.0, %v257
    %v259 = vtanh.pop %v252
    %v260 = vld [vmem:[#allocation7] sm:$0xff]
    %v261 = vadd.f32 %v260, %v259
    %v262 = vmul.f32 %v261, %v258
    %v263 = vtanh.pop %v262
    %v264 = vmul.f32 %v263, %v258
    %265 = vst.msk [vmem:[#allocation11] sm:$0xff] %vm97, %v264
    %266 = vst.msk [vmem:[#allocation12] sm:$0xff] %vm97, %v262
    // Predicated region
    $region46: #{_lstm_cell_impl.1} parent=1 // pred_check
      _
    $region47: #{_lstm_cell_impl.1} parent=1 // pred_check_branch
      %268 = sbr.rel (0) target = $region49
    $region48: #{_lstm_cell_impl.1} parent=1 // pred_region
      %s270 = ssub.s32 128, 128
      %271 = vsyncadd [#allocation4], %s270
      %s273 = sshll.u32 [#allocation11], 4
      %s274 = int_to_ptr.vmem [resolvable:$true] %s273
      %276 = dma.vmem_to_hbm [thread:$0]  %s274, 128, %s6, [#allocation4]
    $region49: #{_lstm_cell_impl.1} parent=1 // pred_fallthru
      _
    // Predicated region
    $region50: #{_lstm_cell_impl.1} parent=1 // pred_check
      _
    $region51: #{_lstm_cell_impl.1} parent=1 // pred_check_branch
      %278 = sbr.rel (0) target = $region53
    $region52: #{_lstm_cell_impl.1} parent=1 // pred_region
      %s280 = ssub.s32 128, 128
      %281 = vsyncadd [#allocation13], %s280
      %s283 = sshll.u32 [#allocation12], 4
      %s284 = int_to_ptr.vmem [resolvable:$true] %s283
      %286 = dma.vmem_to_hbm [thread:$0]  %s284, 128, %s7, [#allocation13]
    $region53: #{_lstm_cell_impl.1} parent=1 // pred_fallthru
      _
    // Predicated region
    $region54: #{_lstm_cell_impl.1} parent=1 // pred_check
      _
    $region55: #{_lstm_cell_impl.1} parent=1 // pred_check_branch
      %288 = sbr.rel (0) target = $region57
    $region56: #{_lstm_cell_impl.1} parent=1 // pred_region
      %289 = dma.done [#allocation4], 128
    $region57: #{_lstm_cell_impl.1} parent=1 // pred_fallthru
      _
    // Predicated region
    $region58: #{_lstm_cell_impl.1} parent=1 // pred_check
      _
    $region59: #{_lstm_cell_impl.1} parent=1 // pred_check_branch
      %291 = sbr.rel (0) target = $region61
    $region60: #{_lstm_cell_impl.1} parent=1 // pred_region
      %292 = dma.done [#allocation13], 128
    $region61: #{_lstm_cell_impl.1} parent=1 // pred_fallthru
      _
    %293 = vsyncpa [#allocation3], 1
    %294 = vsyncpa [#allocation6], 1
    %295 = vsyncpa [#allocation9], 1
    %296 = vsyncpa [#allocation4], 1
    %297 = vsyncpa [#allocation13], 1

</llo_original>
